<compile_context>
chip_gen: v7x
topology: tpu7x:2x2x1
jax: 0.10.0
libtpu: 0.0.40
codegen_flags: <defaults>
</compile_context>

<pallas_src>
import functools
import math

import jax
import jax.numpy as jnp
from jax.experimental import pallas as pl
from jax.experimental.pallas import tpu as pltpu


# ---------------------------------------------------------------------------
# helpers
# ---------------------------------------------------------------------------
def _round_up(x, m):
    return (x + m - 1) // m * m


def _choose_tile_n(batch_size, n_rows, desired=2048):
    """Per-scene row tile: as large as possible (amortize ~0.35us/grid-step), but
    (a) a multiple of 8, (b) with minimal padding, (c) >= 2 grid steps when B == 1
    so v7x megacore can shard the grid across both TensorCores."""
    n_pad8 = _round_up(max(n_rows, 1), 8)
    desired = _round_up(max(desired, 8), 8)
    n_chunks = max(1, -(-n_pad8 // desired))
    if batch_size == 1 and n_pad8 > 8:
        n_chunks = max(n_chunks, 2)
    return _round_up(-(-n_pad8 // n_chunks), 8)


def sinusoidal_time_embedding(t, dim):
    """t: (B,) float -> (B, dim) standard diffusion sinusoidal embedding."""
    half = dim // 2
    freqs = jnp.exp(-math.log(10000.0) * jnp.arange(half, dtype=jnp.float32) / half)
    args = t.astype(jnp.float32)[:, None] * freqs[None, :]
    return jnp.concatenate([jnp.sin(args), jnp.cos(args)], axis=-1)


# ---------------------------------------------------------------------------
# Pallas kernels
# ---------------------------------------------------------------------------
def _grad_kernel(x_ref, w_ref, bias_ref, w1ts_ref, grad_ref):
    """Analytic dE/dpose for one (scene, row-tile).

    x_ref   : (1, Tn, Dc) bf16  fused [pose|cond] rows of one scene
    w_ref   : (Dc, H)     bf16  stacked [w1; wc]
    bias_ref: (1, 1, H)   f32   per-scene bias  (temb @ Wt + b1, hoisted)
    w1ts_ref: (H, D)      bf16  W1^T * w2 (energy head folded in at init)
    grad_ref: (1, Tn, D)  f32
    """
    x = x_ref[0]                                                        # (Tn, Dc)
    pre = jnp.dot(x, w_ref[...], preferred_element_type=jnp.float32) + bias_ref[0]
    h = jnp.tanh(pre)                                                   # f32 (EUP)
    dpre = (1.0 - h * h).astype(jnp.bfloat16)                           # w2 folded into w1ts
    grad = jnp.dot(dpre, w1ts_ref[...], preferred_element_type=jnp.float32)
    grad_ref[0] = grad.astype(grad_ref.dtype)


def _energy_kernel(x_ref, w_ref, bias_ref, w2_ref, e_ref, *, n_valid):
    """Masked in-kernel energy reduction into a per-scene (1,1,1) accumulator."""
    nt = pl.program_id(1)

    @pl.when(nt == 0)
    def _():
        e_ref[...] = jnp.zeros_like(e_ref)

    x = x_ref[0]                                                        # (Tn, Dc)
    pre = jnp.dot(x, w_ref[...], preferred_element_type=jnp.float32) + bias_ref[0]
    h = jnp.tanh(pre)
    e_rows = jnp.sum(h * w2_ref[...], axis=-1, keepdims=True)           # (Tn, 1)
    tile_n = e_rows.shape[0]
    row_ids = nt * tile_n + jax.lax.broadcasted_iota(jnp.int32, (tile_n, 1), 0)
    e_rows = jnp.where(row_ids < n_valid, e_rows, 0.0)                  # mask padded rows
    e_ref[...] += jnp.sum(e_rows).reshape(1, 1, 1)


def _grad_energy_kernel(x_ref, w_ref, bias_ref, w2_ref, w1ts_ref,
                        grad_ref, e_ref, *, n_valid):
    """Combined pass: gradients + per-scene energy partial (shares matmul / tanh)."""
    nt = pl.program_id(1)

    @pl.when(nt == 0)
    def _():
        e_ref[...] = jnp.zeros_like(e_ref)

    x = x_ref[0]
    pre = jnp.dot(x, w_ref[...], preferred_element_type=jnp.float32) + bias_ref[0]
    h = jnp.tanh(pre)

    e_rows = jnp.sum(h * w2_ref[...], axis=-1, keepdims=True)
    tile_n = e_rows.shape[0]
    row_ids = nt * tile_n + jax.lax.broadcasted_iota(jnp.int32, (tile_n, 1), 0)
    e_ref[...] += jnp.sum(jnp.where(row_ids < n_valid, e_rows, 0.0)).reshape(1, 1, 1)

    dpre = (1.0 - h * h).astype(jnp.bfloat16)
    grad_ref[0] = jnp.dot(dpre, w1ts_ref[...],
                          preferred_element_type=jnp.float32).astype(grad_ref.dtype)


# ---------------------------------------------------------------------------
# pallas_call wrappers
# ---------------------------------------------------------------------------
def _cost(B, N, Dc, H, D, out_bytes):
    return pl.CostEstimate(
        flops=2 * B * N * Dc * H + 2 * B * N * H * D,
        transcendentals=B * N * H,
        bytes_accessed=B * N * Dc * 2 + (Dc * H + H * D) * 2 + B * H * 4 + out_bytes,
    )


def ebm_gradients(x_pad, bias, params, *, tile_n):
    """x_pad: (B, N_pad, Dc) bf16, bias: (B, 1, H) f32 -> (B, N_pad, D) f32."""
    B, N_pad, Dc = x_pad.shape
    H = params["w_stack"].shape[1]
    D = params["w1t_scaled"].shape[1]
    nt = N_pad // tile_n
    return pl.pallas_call(
        _grad_kernel,
        out_shape=jax.ShapeDtypeStruct((B, N_pad, D), jnp.float32),
        grid_spec=pltpu.PrefetchScalarGridSpec(
            num_scalar_prefetch=0,
            grid=(B, nt),
            in_specs=[
                pl.BlockSpec((1, tile_n, Dc), lambda b, n: (b, n, 0)),   # fused rows
                pl.BlockSpec((Dc, H), lambda b, n: (0, 0)),              # stacked W (bf16)
                pl.BlockSpec((1, 1, H), lambda b, n: (b, 0, 0)),         # per-scene bias
                pl.BlockSpec((H, D), lambda b, n: (0, 0)),               # W1^T * w2 (bf16)
            ],
            out_specs=pl.BlockSpec((1, tile_n, D), lambda b, n: (b, n, 0)),
        ),
        compiler_params=pltpu.CompilerParams(
            dimension_semantics=("parallel", "parallel")),
        cost_estimate=_cost(B, N_pad, Dc, H, D, B * N_pad * D * 4),
    )(x_pad, params["w_stack"], bias, params["w1t_scaled"])


def ebm_energy_sum(x_pad, bias, params, *, tile_n, n_valid):
    """Masked per-scene energy partials reduced in-kernel -> scalar (w/o b2 term)."""
    B, N_pad, Dc = x_pad.shape
    H = params["w_stack"].shape[1]
    nt = N_pad // tile_n
    e = pl.pallas_call(
        functools.partial(_energy_kernel, n_valid=n_valid),
        out_shape=jax.ShapeDtypeStruct((B, 1, 1), jnp.float32),
        grid_spec=pltpu.PrefetchScalarGridSpec(
            num_scalar_prefetch=0,
            grid=(B, nt),
            in_specs=[
                pl.BlockSpec((1, tile_n, Dc), lambda b, n: (b, n, 0)),
                pl.BlockSpec((Dc, H), lambda b, n: (0, 0)),
                pl.BlockSpec((1, 1, H), lambda b, n: (b, 0, 0)),
                pl.BlockSpec((1, H), lambda b, n: (0, 0)),               # w2 row (f32, VPU)
            ],
            out_specs=pl.BlockSpec((1, 1, 1), lambda b, n: (b, 0, 0)),   # accumulator over n
        ),
        compiler_params=pltpu.CompilerParams(
            dimension_semantics=("parallel", "arbitrary")),
        cost_estimate=_cost(B, N_pad, Dc, H, 1, B * 4),
    )(x_pad, params["w_stack"], bias, params["w2_row"])
    return jnp.sum(e)


def ebm_grad_and_energy(x_pad, bias, params, *, tile_n, n_valid):
    """One pass producing both gradients and the (masked) energy sum (w/o b2 term)."""
    B, N_pad, Dc = x_pad.shape
    H = params["w_stack"].shape[1]
    D = params["w1t_scaled"].shape[1]
    nt = N_pad // tile_n
    grad, e = pl.pallas_call(
        functools.partial(_grad_energy_kernel, n_valid=n_valid),
        out_shape=(jax.ShapeDtypeStruct((B, N_pad, D), jnp.float32),
                   jax.ShapeDtypeStruct((B, 1, 1), jnp.float32)),
        grid_spec=pltpu.PrefetchScalarGridSpec(
            num_scalar_prefetch=0,
            grid=(B, nt),
            in_specs=[
                pl.BlockSpec((1, tile_n, Dc), lambda b, n: (b, n, 0)),
                pl.BlockSpec((Dc, H), lambda b, n: (0, 0)),
                pl.BlockSpec((1, 1, H), lambda b, n: (b, 0, 0)),
                pl.BlockSpec((1, H), lambda b, n: (0, 0)),
                pl.BlockSpec((H, D), lambda b, n: (0, 0)),
            ],
            out_specs=[pl.BlockSpec((1, tile_n, D), lambda b, n: (b, n, 0)),
                       pl.BlockSpec((1, 1, 1), lambda b, n: (b, 0, 0))],
        ),
        compiler_params=pltpu.CompilerParams(
            dimension_semantics=("parallel", "arbitrary")),
        cost_estimate=_cost(B, N_pad, Dc, H, D, B * N_pad * D * 4 + B * 4),
    )(x_pad, params["w_stack"], bias, params["w2_row"], params["w1t_scaled"])
    return grad, jnp.sum(e)


# ---------------------------------------------------------------------------
# parameters + wrapper module
# ---------------------------------------------------------------------------
def init_params(key, pose_dim, cond_dim, temb_dim, hidden):
    ks = jax.random.split(key, 6)
    scale = lambda fan_in: 1.0 / math.sqrt(fan_in)
    w1 = jax.random.normal(ks[0], (pose_dim, hidden), jnp.float32) * scale(pose_dim)
    wc = jax.random.normal(ks[1], (cond_dim, hidden), jnp.float32) * scale(cond_dim)
    wt = jax.random.normal(ks[2], (temb_dim, hidden), jnp.float32) * scale(temb_dim)
    w2 = jax.random.normal(ks[3], (hidden, 1), jnp.float32) * scale(hidden)
    b1 = jax.random.normal(ks[4], (1, hidden), jnp.float32) * 0.1
    b2 = jax.random.normal(ks[5], (1, 1), jnp.float32) * 0.1
    w_stack_f32 = jnp.concatenate([w1, wc], axis=0)              # (D+C, H)  (temb hoisted out)
    return {
        # kernel-side MXU operands, pre-cast to bf16 once at init
        "w_stack": w_stack_f32.astype(jnp.bfloat16),             # (D+C, H)
        "w1t_scaled": (w1.T * w2).astype(jnp.bfloat16),          # (H, D), energy head folded in
        # f32 parameters (wrapper-side / VPU-side)
        "w_stack_f32": w_stack_f32,
        "wt": wt,                                                # (T, H) time-embed projection
        "b1": b1,                                                # (1, H)
        "w2_row": w2.T,                                          # (1, H)
        "b2": b2,                                                # (1, 1), hoisted out of kernels
    }


class ComposedEBMDenoiseFn:
    """JAX/Pallas port of the PyTorch wrapper:
    forward -> gradients, neg_logp_unnorm -> energy.sum()."""

    def __init__(self, params, temb_dim, ebm_per_steps=1, tile_rows=2048):
        self.params = params
        self.temb_dim = temb_dim
        self.ebm_per_steps = ebm_per_steps
        self.energy_wrapper = True
        self.tile_rows = tile_rows

    def _prep(self, poses_in, batch, t):
        poses_in = jnp.asarray(poses_in, jnp.float32)            # (B, N, D)
        batch = jnp.asarray(batch, jnp.float32)                  # (B, N, C)
        t = jnp.asarray(t, jnp.float32)                          # (B,)
        B, N, D = poses_in.shape
        # hoisted time-embedding projection: tiny XLA matmul -> per-scene bias in H-space
        temb = sinusoidal_time_embedding(t, self.temb_dim)                     # (B, T)
        bias = (temb @ self.params["wt"] + self.params["b1"])[:, None, :]      # (B, 1, H) f32
        # fused [pose | cond] features, built directly in bf16 (halves input HBM bytes)
        x = jnp.concatenate([poses_in, batch], axis=-1).astype(jnp.bfloat16)   # (B, N, Dc)
        tile_n = _choose_tile_n(B, N, self.tile_rows)
        n_pad = _round_up(N, tile_n)
        if n_pad != N:
            x = jnp.pad(x, ((0, 0), (0, n_pad - N), (0, 0)))
        return x, bias, tile_n, (B, N, D)

    def forward(self, poses_in, batch, t, **kwargs):
        kwargs["tag"] = "EBM"   # tag only routes inside the original model
        x, bias, tile_n, (B, N, D) = self._prep(poses_in, batch, t)
        grad = ebm_gradients(x, bias, self.params, tile_n=tile_n)
        return grad[:, :N, :]

    def neg_logp_unnorm(self, poses_in, batch, t, **kwargs):
        kwargs["tag"] = "EBM"
        x, bias, tile_n, (B, N, D) = self._prep(poses_in, batch, t)
        e = ebm_energy_sum(x, bias, self.params, tile_n=tile_n, n_valid=N)
        # b2 is a true scalar added once per pose row; hoisted out of the kernel.
        return e + self.params["b2"][0, 0] * (B * N)

    def forward_with_energy(self, poses_in, batch, t, **kwargs):
        """Single-pass variant for callers that need both gradients and energy.sum()."""
        kwargs["tag"] = "EBM"
        x, bias, tile_n, (B, N, D) = self._prep(poses_in, batch, t)
        grad, e = ebm_grad_and_energy(x, bias, self.params, tile_n=tile_n, n_valid=N)
        return grad[:, :N, :], e + self.params["b2"][0, 0] * (B * N)

    __call__ = forward


# ---------------------------------------------------------------------------
if __name__ == "__main__":
    B, N, D = 2, 8, 4          # 2 scenes, 8 poses each, 4-dim pose vectors
    C = 8                      # conditioning (scene-graph) feature dim
    TEMB = 16
    HIDDEN = 32

    key = jax.random.PRNGKey(0)
    k_pose, k_cond, k_t, k_params = jax.random.split(key, 4)

    poses_in = jax.random.normal(k_pose, (B, N, D), jnp.float32)
    batch = jax.random.normal(k_cond, (B, N, C), jnp.float32)
    t = jax.random.randint(k_t, (B,), 0, 1000).astype(jnp.float32)

    params = init_params(k_params, D, C, TEMB, HIDDEN)
    denoise_fn = ComposedEBMDenoiseFn(params, temb_dim=TEMB)

    gradients = denoise_fn(poses_in, batch, t)
    energy_sum = denoise_fn.neg_logp_unnorm(poses_in, batch, t)
    grad_c, energy_c = denoise_fn.forward_with_energy(poses_in, batch, t)
    jax.block_until_ready((gradients, energy_sum, grad_c, energy_c))

    # ------------------------------------------------------------------
    # Reference 1: mirrors the kernel math exactly (bf16 MXU operands on both
    # matmuls, f32 elementwise) -> tight tolerance.
    # ------------------------------------------------------------------
    def ref_mirrored(poses):
        temb = sinusoidal_time_embedding(t, TEMB)
        bias = temb @ params["wt"] + params["b1"]                          # (B, H)
        x = jnp.concatenate([poses, batch], axis=-1)
        x = x.astype(jnp.bfloat16).astype(jnp.float32)
        w = params["w_stack"].astype(jnp.float32)                          # bf16 -> f32
        pre = jnp.einsum("bnd,dh->bnh", x, w) + bias[:, None, :]
        h = jnp.tanh(pre)
        e_rows = (h * params["w2_row"][0]).sum(-1) + params["b2"][0, 0]
        dpre = (1.0 - h * h).astype(jnp.bfloat16).astype(jnp.float32)
        w1ts = params["w1t_scaled"].astype(jnp.float32)
        grad = jnp.einsum("bnh,hd->bnd", dpre, w1ts)
        return grad, e_rows.sum()

    ref_grad_m, ref_e_m = ref_mirrored(poses_in)
    assert gradients.shape == poses_in.shape
    assert jnp.allclose(gradients, ref_grad_m, atol=5e-3, rtol=5e-3)
    assert jnp.allclose(energy_sum, ref_e_m, atol=5e-3, rtol=5e-3)
    # combined kernel must agree with the separate kernels
    assert jnp.allclose(grad_c, gradients, atol=1e-5, rtol=1e-5)
    assert jnp.allclose(energy_c, energy_sum, atol=1e-5, rtol=1e-5)

    # ------------------------------------------------------------------
    # Reference 2: full-f32 energy + jax.grad (loose tolerance: the kernel uses
    # bf16 MXU operands, which introduces ~0.4% input quantization).
    # ------------------------------------------------------------------
    def ref_energy_f32(poses):
        temb = sinusoidal_time_embedding(t, TEMB)
        bias = temb @ params["wt"] + params["b1"]
        x = jnp.concatenate([poses, batch], axis=-1)
        pre = jnp.einsum("bnd,dh->bnh", x, params["w_stack_f32"]) + bias[:, None, :]
        h = jnp.tanh(pre)
        return ((h * params["w2_row"][0]).sum(-1) + params["b2"][0, 0]).sum()

    ref_grad_f32 = jax.grad(ref_energy_f32)(poses_in)
    assert jnp.allclose(gradients, ref_grad_f32, atol=5e-2, rtol=5e-2)
    assert jnp.allclose(energy_sum, ref_energy_f32(poses_in), atol=2e-1, rtol=5e-2)

    print("KERNEL_OK")
</pallas_src>

<mosaic_0001>
module attributes {stable_mosaic.version = 11 : i64} {
  func.func @_grad_kernel(%arg0: i32, %arg1: i32, %arg2: memref<1x8x12xbf16, #tpu.memory_space<vmem>>, %arg3: memref<12x32xbf16, #tpu.memory_space<vmem>>, %arg4: memref<1x1x32xf32, #tpu.memory_space<vmem>>, %arg5: memref<32x4xbf16, #tpu.memory_space<vmem>>, %arg6: memref<1x8x4xf32, #tpu.memory_space<vmem>>) attributes {dimension_semantics = [#tpu.dimension_semantics<parallel>, #tpu.dimension_semantics<parallel>], iteration_bounds = array<i64: 2, 1>, scalar_prefetch = 0 : i64, scratch_operands = 0 : i64, tpu.core_type = #tpu.core_type<tc>, window_params = [{transform_indices = @transform_0, window_bounds = array<i64: 1, 8, 12>}, {pipeline_mode = #tpu.pipeline_mode<synchronous>, transform_indices = @transform_1, window_bounds = array<i64: 12, 32>}, {transform_indices = @transform_2, window_bounds = array<i64: 1, 1, 32>}, {pipeline_mode = #tpu.pipeline_mode<synchronous>, transform_indices = @transform_3, window_bounds = array<i64: 32, 4>}, {transform_indices = @transform_4, window_bounds = array<i64: 1, 8, 4>}]} {
    %c0 = arith.constant 0 : index
    %c0_0 = arith.constant 0 : index
    %c0_1 = arith.constant 0 : index
    %0 = vector.load %arg2[%c0, %c0_0, %c0_1] : memref<1x8x12xbf16, #tpu.memory_space<vmem>>, vector<1x8x12xbf16>
    %1 = vector.shape_cast %0 : vector<1x8x12xbf16> to vector<8x12xbf16>
    %c0_2 = arith.constant 0 : index
    %c0_3 = arith.constant 0 : index
    %2 = vector.load %arg3[%c0_2, %c0_3] : memref<12x32xbf16, #tpu.memory_space<vmem>>, vector<12x32xbf16>
    %cst = arith.constant dense<0.000000e+00> : vector<8x32xf32>
    %3 = tpu.matmul %1, %2, %cst {dimension_numbers = #tpu.dot_dimension_numbers<[1], [0], [0], [1], [0, 0, 1, 1], [], []>} : vector<8x12xbf16>, vector<12x32xbf16>, vector<8x32xf32> -> vector<8x32xf32>
    %c0_4 = arith.constant 0 : index
    %c0_5 = arith.constant 0 : index
    %c0_6 = arith.constant 0 : index
    %4 = vector.load %arg4[%c0_4, %c0_5, %c0_6] : memref<1x1x32xf32, #tpu.memory_space<vmem>>, vector<1x1x32xf32>
    %5 = vector.shape_cast %4 : vector<1x1x32xf32> to vector<1x32xf32>
    %6 = vector.broadcast %5 : vector<1x32xf32> to vector<8x32xf32>
    %7 = arith.addf %3, %6 : vector<8x32xf32>
    %8 = math.tanh %7 : vector<8x32xf32>
    %9 = arith.mulf %8, %8 : vector<8x32xf32>
    %cst_7 = arith.constant 1.000000e+00 : f32
    %10 = vector.broadcast %cst_7 : f32 to vector<8x32xf32>
    %11 = arith.subf %10, %9 : vector<8x32xf32>
    %12 = arith.truncf %11 : vector<8x32xf32> to vector<8x32xbf16>
    %c0_8 = arith.constant 0 : index
    %c0_9 = arith.constant 0 : index
    %13 = vector.load %arg5[%c0_8, %c0_9] : memref<32x4xbf16, #tpu.memory_space<vmem>>, vector<32x4xbf16>
    %cst_10 = arith.constant dense<0.000000e+00> : vector<8x4xf32>
    %14 = tpu.matmul %12, %13, %cst_10 {dimension_numbers = #tpu.dot_dimension_numbers<[1], [0], [0], [1], [0, 0, 1, 1], [], []>} : vector<8x32xbf16>, vector<32x4xbf16>, vector<8x4xf32> -> vector<8x4xf32>
    %c0_11 = arith.constant 0 : index
    %c0_12 = arith.constant 0 : index
    %c0_13 = arith.constant 0 : index
    %15 = vector.load %arg6[%c0_11, %c0_12, %c0_13] : memref<1x8x4xf32, #tpu.memory_space<vmem>>, vector<1x8x4xf32>
    %16 = vector.shape_cast %15 : vector<1x8x4xf32> to vector<8x4xf32>
    %17 = vector.shape_cast %14 : vector<8x4xf32> to vector<1x8x4xf32>
    tpu.vector_store %arg6[%c0_11, %c0_12, %c0_13], %17 {strides = array<i32>} : memref<1x8x4xf32, #tpu.memory_space<vmem>>, vector<1x8x4xf32>,
    return
  }
  func.func @transform_0(%arg0: i32, %arg1: i32) -> (i32, i32, i32) {
    %c0_i32 = arith.constant 0 : i32
    %c0_i32_0 = arith.constant 0 : i32
    return %arg0, %arg1, %c0_i32 : i32, i32, i32
  }
  func.func @transform_1(%arg0: i32, %arg1: i32) -> (i32, i32) {
    %c0_i32 = arith.constant 0 : i32
    %c0_i32_0 = arith.constant 0 : i32
    %c0_i32_1 = arith.constant 0 : i32
    return %c0_i32, %c0_i32_0 : i32, i32
  }
  func.func @transform_2(%arg0: i32, %arg1: i32) -> (i32, i32, i32) {
    %c0_i32 = arith.constant 0 : i32
    %c0_i32_0 = arith.constant 0 : i32
    %c0_i32_1 = arith.constant 0 : i32
    return %arg0, %c0_i32, %c0_i32_0 : i32, i32, i32
  }
  func.func @transform_3(%arg0: i32, %arg1: i32) -> (i32, i32) {
    %c0_i32 = arith.constant 0 : i32
    %c0_i32_0 = arith.constant 0 : i32
    %c0_i32_1 = arith.constant 0 : i32
    return %c0_i32, %c0_i32_0 : i32, i32
  }
  func.func @transform_4(%arg0: i32, %arg1: i32) -> (i32, i32, i32) {
    %c0_i32 = arith.constant 0 : i32
    %c0_i32_0 = arith.constant 0 : i32
    return %arg0, %arg1, %c0_i32 : i32, i32, i32
  }
}

</mosaic_0001>

<llo_original>
// kernel: tpu_custom_call.1
$region0: #{tpu_custom_call.1}
  #allocation0 [shape = 'u32[]', space=smem, size = 0x4, offset = 0x4, fixed_abs, tag = 'smem constant byte address 0x4 - core index']
  #allocation1 [shape = 'u32[144,128]{1,0:T(1,128)}', space=vmem, size = 0x12000, scoped, tag = 'internal scratch']
  %s0 = inlined_call_operand.vmem [shape: bf16[2,8,12], index: 0, kind: input, shape index: {}]
  %s1 = inlined_call_operand.vmem [shape: bf16[12,32], index: 1, kind: input, shape index: {}]
  %s2 = inlined_call_operand.vmem [shape: f32[2,1,32], index: 2, kind: input, shape index: {}]
  %s3 = inlined_call_operand.vmem [shape: bf16[32,4], index: 3, kind: input, shape index: {}]
  %s4 = inlined_call_operand.vmem [shape: f32[2,8,4], index: 4, kind: output, shape index: {}]
  %s5 = sld [smem:[#allocation0]]
  $region49: #{tpu_custom_call.1} parent=0
    _
  %s7 = ssub.s32 1, %s5
  %s8 = scalar_select 0, %s7, %s5
  loop: start=0, step=1, limit=4
  $region2: #{tpu_custom_call.1} parent=0 // loop_pre_header
    _
  $region3: #{tpu_custom_call.1} parent=0 // loop_header
    %s10 = sphi 0, %s14
    %p11 = scmp.ge.s32.totalorder %s10, 4
    %s17 = sphi 0, %s29
    %s18 = sphi 0, %s25
    %s19 = sphi 0, %s17
    %s20 = sphi 0, %s18
    %s21 = sphi 0, %s19
    %s22 = sphi 0, %s20
    %s34 = sphi 0, %s36
    %s37 = sphi 0, %s34
    %s38 = sphi 0, %s37
    %s54 = sphi 0, %s38
    %s58 = sphi 0, %s58
    %s60 = sphi 0, %s58
    %s61 = sphi 0, %s60
    %s75 = sphi 0, %s61
    %s81 = sphi 0, %s83
    %s84 = sphi 0, %s81
    %s85 = sphi 0, %s84
    %s101 = sphi 0, %s85
    %s105 = sphi 0, %s105
    %s107 = sphi 0, %s105
    %s108 = sphi 0, %s107
    %s122 = sphi 0, %s108
    %s130 = sphi 0, %s132
    %s133 = sphi 0, %s130
    %s134 = sphi 0, %s133
    %s150 = sphi 0, %s134
  $region4: #{tpu_custom_call.1} parent=0 // loop_header_branch
    %13 = sbr.rel (%p11) target = $region8
  $region5: #{tpu_custom_call.1} parent=0 // loop_body
    %s15 = ssub.s32 %s10, 1
    %s16 = ssub.s32 %s10, 2
    %s23 = sadd.s32 1, %s18
    %p24 = scmp.ge.s32.totalorder %s23, 1
    %s25 = scalar_select %p24, 0, %s23
    %s26 = sadd.s32 1, %s17
    %s27 = scalar_select %p24, %s26, %s17
    %p28 = scmp.ge.s32.totalorder %s27, 2
    %s29 = scalar_select %p28, 0, %s27
    %s30 = ssub.s32 %s17, %s29
    %s31 = ssub.s32 %s18, %s25
    %s32 = sor.u32 %s30, %s31
    %p33 = scmp.eq.s32.totalorder %s32, 0
    %s35 = sadd.s32 %s34, 1
    %s36 = scalar_select %p33, %s34, %s35
    %p39 = pneg %p33
    %p40 = scmp.eq.s32.totalorder %s10, 1
    %p41 = por %p39, %p40
    %p42 = scmp.ne.s32.totalorder %s34, %s37
    %p43 = scmp.eq.s32.totalorder %s10, 0
    %p44 = por %p42, %p43
    %p45 = scmp.ne.s32.totalorder %s34, %s37
    %p46 = scmp.eq.s32.totalorder %s15, 1
    %p47 = por %p45, %p46
    %p48 = scmp.ne.s32.totalorder %s37, %s38
    %p49 = scmp.eq.s32.totalorder %s15, 0
    %p50 = por %p48, %p49
    %p51 = scmp.ne.s32.totalorder %s37, %s38
    %p52 = scmp.eq.s32.totalorder %s16, 1
    %p53 = por %p51, %p52
    %p55 = scmp.ne.s32.totalorder %s38, %s54
    %p56 = scmp.eq.s32.totalorder %s16, 0
    %p57 = por %p55, %p56
    %s59 = sadd.s32 %s58, 1
    %p62 = scmp.eq.s32.totalorder %s10, 1
    %p63 = scmp.ne.s32.totalorder %s58, %s60
    %p64 = scmp.eq.s32.totalorder %s10, 0
    %p65 = por %p63, %p64
    %p66 = scmp.ne.s32.totalorder %s58, %s60
    %p67 = scmp.eq.s32.totalorder %s15, 1
    %p68 = por %p66, %p67
    %p69 = scmp.ne.s32.totalorder %s60, %s61
    %p70 = scmp.eq.s32.totalorder %s15, 0
    %p71 = por %p69, %p70
    %p72 = scmp.ne.s32.totalorder %s60, %s61
    %p73 = scmp.eq.s32.totalorder %s16, 1
    %p74 = por %p72, %p73
    %p76 = scmp.ne.s32.totalorder %s61, %s75
    %p77 = scmp.eq.s32.totalorder %s16, 0
    %p78 = por %p76, %p77
    %s79 = ssub.s32 %s17, %s29
    %p80 = scmp.eq.s32.totalorder %s79, 0
    %s82 = sadd.s32 %s81, 1
    %s83 = scalar_select %p80, %s81, %s82
    %p86 = pneg %p80
    %p87 = scmp.eq.s32.totalorder %s10, 1
    %p88 = por %p86, %p87
    %p89 = scmp.ne.s32.totalorder %s81, %s84
    %p90 = scmp.eq.s32.totalorder %s10, 0
    %p91 = por %p89, %p90
    %p92 = scmp.ne.s32.totalorder %s81, %s84
    %p93 = scmp.eq.s32.totalorder %s15, 1
    %p94 = por %p92, %p93
    %p95 = scmp.ne.s32.totalorder %s84, %s85
    %p96 = scmp.eq.s32.totalorder %s15, 0
    %p97 = por %p95, %p96
    %p98 = scmp.ne.s32.totalorder %s84, %s85
    %p99 = scmp.eq.s32.totalorder %s16, 1
    %p100 = por %p98, %p99
    %p102 = scmp.ne.s32.totalorder %s85, %s101
    %p103 = scmp.eq.s32.totalorder %s16, 0
    %p104 = por %p102, %p103
    %s106 = sadd.s32 %s105, 1
    %p109 = scmp.eq.s32.totalorder %s10, 1
    %p110 = scmp.ne.s32.totalorder %s105, %s107
    %p111 = scmp.eq.s32.totalorder %s10, 0
    %p112 = por %p110, %p111
    %p113 = scmp.ne.s32.totalorder %s105, %s107
    %p114 = scmp.eq.s32.totalorder %s15, 1
    %p115 = por %p113, %p114
    %p116 = scmp.ne.s32.totalorder %s107, %s108
    %p117 = scmp.eq.s32.totalorder %s15, 0
    %p118 = por %p116, %p117
    %p119 = scmp.ne.s32.totalorder %s107, %s108
    %p120 = scmp.eq.s32.totalorder %s16, 1
    %p121 = por %p119, %p120
    %p123 = scmp.ne.s32.totalorder %s108, %s122
    %p124 = scmp.eq.s32.totalorder %s16, 0
    %p125 = por %p123, %p124
    %s126 = ssub.s32 %s17, %s29
    %s127 = ssub.s32 %s18, %s25
    %s128 = sor.u32 %s126, %s127
    %p129 = scmp.eq.s32.totalorder %s128, 0
    %s131 = sadd.s32 %s130, 1
    %s132 = scalar_select %p129, %s130, %s131
    %p135 = pneg %p129
    %p136 = scmp.eq.s32.totalorder %s10, 1
    %p137 = por %p135, %p136
    %p138 = scmp.ne.s32.totalorder %s130, %s133
    %p139 = scmp.eq.s32.totalorder %s10, 0
    %p140 = por %p138, %p139
    %p141 = scmp.ne.s32.totalorder %s130, %s133
    %p142 = scmp.eq.s32.totalorder %s15, 1
    %p143 = por %p141, %p142
    %p144 = scmp.ne.s32.totalorder %s133, %s134
    %p145 = scmp.eq.s32.totalorder %s15, 0
    %p146 = por %p144, %p145
    %p147 = scmp.ne.s32.totalorder %s133, %s134
    %p148 = scmp.eq.s32.totalorder %s16, 1
    %p149 = por %p147, %p148
    %p151 = scmp.ne.s32.totalorder %s134, %s150
    %p152 = scmp.eq.s32.totalorder %s16, 0
    %p153 = por %p151, %p152
    %p154 = scmp.le.s32.totalorder 1, %s10
    %p155 = scmp.lt.s32.totalorder %s10, 3
    %p156 = pnand %p154, %p155
    %p157 = pneg %p156
    // Predicated region
    $region9: #{tpu_custom_call.1} parent=5 // pred_check
      _
    $region10: #{tpu_custom_call.1} parent=5 // pred_check_branch
      %159 = sbr.rel (%p156) target = $region12
    $region11: #{tpu_custom_call.1} parent=5 // pred_region
      %s160 = ssub.s32 %s10, 1
      // Predicated region
      $region13: #{tpu_custom_call.1} parent=11 // pred_check
        %p161 = pneg %p71
      $region14: #{tpu_custom_call.1} parent=11 // pred_check_branch
        %163 = sbr.rel (%p161) target = $region16
      $region15: #{tpu_custom_call.1} parent=11 // pred_region
        _
      $region16: #{tpu_custom_call.1} parent=11 // pred_fallthru
        _
      // Predicated region
      $region17: #{tpu_custom_call.1} parent=11 // pred_check
        %p164 = pneg %p118
      $region18: #{tpu_custom_call.1} parent=11 // pred_check_branch
        %166 = sbr.rel (%p164) target = $region20
      $region19: #{tpu_custom_call.1} parent=11 // pred_region
        _
      $region20: #{tpu_custom_call.1} parent=11 // pred_fallthru
        _
    $region12: #{tpu_custom_call.1} parent=5 // pred_fallthru
      _
    %p167 = scmp.lt.s32.totalorder %s10, 2
    // Predicated region
    $region21: #{tpu_custom_call.1} parent=5 // pred_check
      %p168 = pneg %p167
    $region22: #{tpu_custom_call.1} parent=5 // pred_check_branch
      %170 = sbr.rel (%p168) target = $region24
    $region23: #{tpu_custom_call.1} parent=5 // pred_region
      // Predicated region
      $region25: #{tpu_custom_call.1} parent=23 // pred_check
        %p171 = pneg %p44
      $region26: #{tpu_custom_call.1} parent=23 // pred_check_branch
        %173 = sbr.rel (%p171) target = $region28
      $region27: #{tpu_custom_call.1} parent=23 // pred_region
        %p174 = scmp.lt.s32.totalorder %s17, 1
        %s175 = scalar_select %p174, %s17, 1
        %p176 = scmp.lt.s32.totalorder %s18, 0
        %s177 = scalar_select %p176, %s18, 0
        %s178 = sadd.s32 %s177, %s175
        %s179 = smul.addr %s178, 4
        %s180 = scalar_lea.vmem %s0, %s179
      $region28: #{tpu_custom_call.1} parent=23 // pred_fallthru
        _
      // Predicated region
      $region29: #{tpu_custom_call.1} parent=23 // pred_check
        %p181 = pneg %p91
      $region30: #{tpu_custom_call.1} parent=23 // pred_check_branch
        %183 = sbr.rel (%p181) target = $region32
      $region31: #{tpu_custom_call.1} parent=23 // pred_region
        %p184 = scmp.lt.s32.totalorder %s17, 1
        %s185 = scalar_select %p184, %s17, 1
        %s186 = scalar_lea.vmem %s2, %s185
      $region32: #{tpu_custom_call.1} parent=23 // pred_fallthru
        _
    $region24: #{tpu_custom_call.1} parent=5 // pred_fallthru
      _
    %p187 = scmp.le.s32.totalorder 1, %s10
    %p188 = scmp.lt.s32.totalorder %s10, 3
    %p189 = pnand %p187, %p188
    %p190 = pneg %p189
    // Predicated region
    $region33: #{tpu_custom_call.1} parent=5 // pred_check
      _
    $region34: #{tpu_custom_call.1} parent=5 // pred_check_branch
      %192 = sbr.rel (%p189) target = $region36
    $region35: #{tpu_custom_call.1} parent=5 // pred_region
      %s193 = ssub.s32 %s10, 1
      %p194 = scmp.lt.s32.totalorder %s19, 1
      %s195 = scalar_select %p194, %s19, 1
      %p196 = scmp.lt.s32.totalorder %s20, 0
      %s197 = scalar_select %p196, %s20, 0
      %s198 = sadd.s32 %s197, %s195
      %s199 = smul.addr %s198, 4
      %s200 = scalar_lea.vmem %s0, %s199
      %p201 = pneg %p50
      %p202 = pneg %p47
      %p203 = pneg %p71
      %p204 = pneg %p68
      %p205 = scmp.lt.s32.totalorder %s19, 1
      %s206 = scalar_select %p205, %s19, 1
      %s207 = scalar_lea.vmem %s2, %s206
      %p208 = pneg %p97
      %p209 = pneg %p94
      %p210 = pneg %p118
      %p211 = pneg %p115
      %p212 = pneg %p146
      %p213 = pneg %p143
      %p214 = scmp.lt.s32.totalorder %s19, 1
      %s215 = scalar_select %p214, %s19, 1
      %p216 = scmp.lt.s32.totalorder %s20, 0
      %s217 = scalar_select %p216, %s20, 0
      %s218 = sadd.s32 %s217, %s215
      %s219 = smul.addr %s218, 8
      %s220 = scalar_lea.vmem %s4, %s219
      %p221 = scmp.lt.s32.totalorder %s19, 1
      %s222 = scalar_select %p221, %s19, 1
      %p223 = scmp.lt.s32.totalorder %s20, 0
      %s224 = scalar_select %p223, %s20, 0
      %s225 = sadd.s32 %s224, %s222
      %s226 = smul.addr %s225, 4
      %s227 = scalar_lea.vmem %s0, %s226
      %p228 = scmp.lt.s32.totalorder %s19, 1
      %s229 = scalar_select %p228, %s19, 1
      %s230 = scalar_lea.vmem %s2, %s229
      %p231 = scmp.lt.s32.totalorder %s19, 1
      %s232 = scalar_select %p231, %s19, 1
      %p233 = scmp.lt.s32.totalorder %s20, 0
      %s234 = scalar_select %p233, %s20, 0
      %s235 = sadd.s32 %s234, %s232
      %s236 = smul.addr %s235, 8
      %s237 = scalar_lea.vmem %s4, %s236
      %v239 = vld [vmem:[%s227] sm:$0xf]
      %v240 = vld [vmem:[%s1] sm:$0xf]
      %v241 = vld [vmem:[%s1 + $0x4] sm:$0x3]
      %v242 = vld [vmem:[%s230] sm:$0x1]
      %v244 = vlaneseq
      %v245 = vshrl.u32 %v244, 7
      %v246 = vsub.s32 0, %v245
      %v247 = vrot.slane %v242, %v246
      %v251 = vunpack.c.l.b16 %v240
      %v252 = vunpack.c.l.b16 %v241
      %v253 = vpack.c.b16 %v252, %v251
      %vm254 = vcmask 97280
      %v256 = vsel %vm254, %v239, 0
      %vm258 = vcmask 1045504
      %v260 = vsel %vm258, %v253, 0
      %262 = vmatprep.subr.bf16.mxu0 0
      %263 = vmatpush1.bf16.msra.mxu0 %v260
      %264 = vmatprep.subr.bf16.mxu0 0
      %265 = vmatpush1.bf16.msra.mxu0 0
      %266 = vmatprep.subr.bf16.mxu0 0
      %267 = vmatpush1.bf16.msra.mxu0 0
      %268 = vmatprep.subr.bf16.mxu0 0
      %269 = vmatpush1.bf16.msra.mxu0 0
      %270 = vmatprep.subr.bf16.mxu0 0
      %271 = vmatpush1.bf16.msra.mxu0 0
      %272 = vmatprep.subr.bf16.mxu0 0
      %273 = vmatpush1.bf16.msra.mxu0 0
      %274 = vmatprep.subr.bf16.mxu0 0
      %275 = vmatpush1.bf16.msra.mxu0 0
      %276 = vmatprep.subr.bf16.mxu0 0
      %277 = vmatpush1.bf16.msra.mxu0 0
      %278 = vmatprep.subr.bf16.mxu0 0
      %279 = vmatpush1.bf16.msra.mxu0 0
      %280 = vmatprep.subr.bf16.mxu0 0
      %281 = vmatpush1.bf16.msra.mxu0 0
      %282 = vmatprep.subr.bf16.mxu0 0
      %283 = vmatpush1.bf16.msra.mxu0 0
      %284 = vmatprep.subr.bf16.mxu0 0
      %285 = vmatpush1.bf16.msra.mxu0 0
      %286 = vmatprep.subr.bf16.mxu0 0
      %287 = vmatpush1.bf16.msra.mxu0 0
      %288 = vmatprep.subr.bf16.mxu0 0
      %289 = vmatpush1.bf16.msra.mxu0 0
      %290 = vmatprep.subr.bf16.mxu0 0
      %291 = vmatpush1.bf16.msra.mxu0 0
      %292 = vmatprep.subr.bf16.mxu0 0
      %293 = vmatpush1.bf16.msra.mxu0 0
      %294 = vmatprep.mubr.bf16.mxu0 0
      %295 = vmatmul.mubr.bf16.gmra.mrb[0].mxu0 %v256
      %v296 = vpop.f32.mrb[0].mxu0
      %v297 = vadd.f32 %v247, %v296
      %v298 = vpop.f32.mrb[0].mxu0
      %v299 = vpop.f32.mrb[0].mxu0
      %v300 = vpop.f32.mrb[0].mxu0
      %301 = vdwg.mxu0
      %v302 = vtanh.pop %v297
      %v303 = vmul.f32 %v302, %v302
      %v304 = vsub.f32 1.0, %v303
      %v305 = vpack.c.bf16 %v304, %v304
      %v306 = vld [vmem:[%s3] sm:$0xf]
      %v307 = vld [vmem:[%s3 + $0x4] sm:$0xf]
      %v308 = vld [vmem:[%s3 + $0x8] sm:$0xf]
      %v309 = vld [vmem:[%s3 + $0xc] sm:$0xf]
      %v314 = vunpack.c.l.b16 %v306
      %v315 = vunpack.c.l.b16 %v307
      %v316 = vunpack.c.l.b16 %v308
      %v317 = vunpack.c.l.b16 %v309
      %v318 = vpack.c.b16 %v315, %v314
      %v319 = vpack.c.b16 %v317, %v316
      %vm322 = vcmask 261120
      %v324 = vsel %vm322, %v305, 0
      %326 = vmatprep.subr.bf16.mxu0 0
      %327 = vmatpush1.bf16.msra.mxu0 %v318
      %328 = vmatprep.subr.bf16.mxu0 0
      %329 = vmatpush1.bf16.msra.mxu0 %v319
      %330 = vmatprep.subr.bf16.mxu0 0
      %331 = vmatpush1.bf16.msra.mxu0 0
      %332 = vmatprep.subr.bf16.mxu0 0
      %333 = vmatpush1.bf16.msra.mxu0 0
      %334 = vmatprep.subr.bf16.mxu0 0
      %335 = vmatpush1.bf16.msra.mxu0 0
      %336 = vmatprep.subr.bf16.mxu0 0
      %337 = vmatpush1.bf16.msra.mxu0 0
      %338 = vmatprep.subr.bf16.mxu0 0
      %339 = vmatpush1.bf16.msra.mxu0 0
      %340 = vmatprep.subr.bf16.mxu0 0
      %341 = vmatpush1.bf16.msra.mxu0 0
      %342 = vmatprep.subr.bf16.mxu0 0
      %343 = vmatpush1.bf16.msra.mxu0 0
      %344 = vmatprep.subr.bf16.mxu0 0
      %345 = vmatpush1.bf16.msra.mxu0 0
      %346 = vmatprep.subr.bf16.mxu0 0
      %347 = vmatpush1.bf16.msra.mxu0 0
      %348 = vmatprep.subr.bf16.mxu0 0
      %349 = vmatpush1.bf16.msra.mxu0 0
      %350 = vmatprep.subr.bf16.mxu0 0
      %351 = vmatpush1.bf16.msra.mxu0 0
      %352 = vmatprep.subr.bf16.mxu0 0
      %353 = vmatpush1.bf16.msra.mxu0 0
      %354 = vmatprep.subr.bf16.mxu0 0
      %355 = vmatpush1.bf16.msra.mxu0 0
      %356 = vmatprep.subr.bf16.mxu0 0
      %357 = vmatpush1.bf16.msra.mxu0 0
      %358 = vmatprep.mubr.bf16.mxu0 0
      %359 = vmatmul.mubr.bf16.gmra.mrb[0].mxu0 %v324
      %v360 = vpop.f32.mrb[0].mxu0
      %v361 = vadd.f32 0.0, %v360
      %v362 = vpop.f32.mrb[0].mxu0
      %v363 = vpop.f32.mrb[0].mxu0
      %v364 = vpop.f32.mrb[0].mxu0
      %365 = vdwg.mxu0
      %vm366 = vcmask 31744
      %367 = vst.msk [vmem:[%s237] sm:$0xff] %vm366, %v361
      %p368 = scmp.lt.s32.totalorder %s19, 1
      %s369 = scalar_select %p368, %s19, 1
      %p370 = scmp.lt.s32.totalorder %s20, 0
      %s371 = scalar_select %p370, %s20, 0
      %s372 = sadd.s32 %s371, %s369
      %s373 = smul.addr %s372, 8
      %s374 = scalar_lea.vmem %s4, %s373
      // Predicated region
      $region37: #{tpu_custom_call.1} parent=35 // pred_check
        %p375 = pneg %p143
      $region38: #{tpu_custom_call.1} parent=35 // pred_check_branch
        %377 = sbr.rel (%p375) target = $region40
      $region39: #{tpu_custom_call.1} parent=35 // pred_region
        _
      $region40: #{tpu_custom_call.1} parent=35 // pred_fallthru
        _
    $region36: #{tpu_custom_call.1} parent=5 // pred_fallthru
      _
    %p378 = scmp.le.s32.totalorder 2, %s10
    // Predicated region
    $region41: #{tpu_custom_call.1} parent=5 // pred_check
      %p379 = pneg %p378
    $region42: #{tpu_custom_call.1} parent=5 // pred_check_branch
      %381 = sbr.rel (%p379) target = $region44
    $region43: #{tpu_custom_call.1} parent=5 // pred_region
      %s382 = ssub.s32 %s10, 2
      // Predicated region
      $region45: #{tpu_custom_call.1} parent=43 // pred_check
        %p383 = pneg %p149
      $region46: #{tpu_custom_call.1} parent=43 // pred_check_branch
        %385 = sbr.rel (%p383) target = $region48
      $region47: #{tpu_custom_call.1} parent=43 // pred_region
        %p386 = scmp.lt.s32.totalorder %s21, 1
        %s387 = scalar_select %p386, %s21, 1
        %p388 = scmp.lt.s32.totalorder %s22, 0
        %s389 = scalar_select %p388, %s22, 0
        %s390 = sadd.s32 %s389, %s387
        %s391 = smul.addr %s390, 8
        %s392 = scalar_lea.vmem %s4, %s391
      $region48: #{tpu_custom_call.1} parent=43 // pred_fallthru
        _
    $region44: #{tpu_custom_call.1} parent=5 // pred_fallthru
      _
  $region6: #{tpu_custom_call.1} parent=0 // loop_footer
    %s14 = sadd.s32 1, %s10
  $region7: #{tpu_custom_call.1} parent=0 // loop_footer_branch
    %9 = sbr.rel target = $region3
  $region8: #{tpu_custom_call.1} parent=0 // loop_exit
    _

</llo_original>
